<compile_context>
chip_gen: v7x
topology: tpu7x:2x2x1
jax: 0.10.0
libtpu: 0.0.40
codegen_flags: <defaults>
</compile_context>

<pallas_src>
import jax
import jax.numpy as jnp
from jax.experimental import pallas as pl
from jax.experimental.pallas import tpu as pltpu


def _round_up(x: int, m: int) -> int:
    return ((x + m - 1) // m) * m


def _hw_config():
    """Generation-specific tile defaults and VMEM budget."""
    try:
        kind = jax.devices()[0].device_kind.lower()
    except Exception:  # pragma: no cover - defensive
        kind = ""
    if "v7" in kind:
        # 64 MiB VMEM per TensorCore, 3.2 TB/s HBM, 2 TCs/chip.
        return dict(tm=512, tn=512, tk=1024, vmem=48 * 1024 * 1024, two_cores=True)
    if "v6" in kind:
        # 128 MiB VMEM, 918 TF/s bf16 -> needs big output tiles.
        return dict(tm=512, tn=1024, tk=2048, vmem=96 * 1024 * 1024, two_cores=False)
    if "v5e" in kind or "v5 lite" in kind or "v5litepod" in kind:
        # 128 MiB VMEM, 197 TF/s bf16, single vst slot -> prefer large tk.
        return dict(tm=512, tn=512, tk=2048, vmem=64 * 1024 * 1024, two_cores=False)
    # Unknown generation: conservative sizing that also fits v7x's VMEM.
    return dict(tm=512, tn=512, tk=1024, vmem=48 * 1024 * 1024, two_cores=False)


def _fits_vmem(tm, tn, tk, in_bytes, out_bytes, k_split, vmem_limit):
    """Double-buffered input/output tiles (+ optional f32 acc) vs. budget."""
    need = 2 * (tm * tk + tk * tn) * in_bytes   # double-buffered x / w tiles
    need += 2 * tm * tn * out_bytes             # double-buffered output tile
    need += 2 * tn * 4                          # bias tile (f32)
    if k_split:
        need += tm * tn * 4                     # f32 accumulator scratch
    return need <= int(vmem_limit * 0.9)        # leave headroom for the compiler


def _linear_kernel_fused_k(x_ref, w_ref, b_ref, o_ref):
    """Whole K reduction in one dot per (tm, tn) output tile."""
    acc = jnp.dot(x_ref[...], w_ref[...], preferred_element_type=jnp.float32)
    o_ref[...] = (acc + b_ref[...]).astype(o_ref.dtype)


def _linear_kernel_split_k(x_ref, w_ref, b_ref, o_ref, acc_ref):
    """K split across grid axis 2; f32 accumulator lives in VMEM scratch."""
    k = pl.program_id(2)

    @pl.when(k == 0)
    def _init():
        acc_ref[...] = jnp.zeros_like(acc_ref)

    acc_ref[...] += jnp.dot(
        x_ref[...], w_ref[...], preferred_element_type=jnp.float32
    )

    @pl.when(k == pl.num_programs(2) - 1)
    def _finalize():
        o_ref[...] = (acc_ref[...] + b_ref[...]).astype(o_ref.dtype)


class PallasLinear:
    """LinearLayer forward with weight/bias cast+pad done once at init."""

    def __init__(self, weight: jax.Array, bias: jax.Array, *,
                 compute_dtype=jnp.bfloat16):
        dim_in, dim_out = weight.shape
        assert bias.shape == (dim_out,), bias.shape
        self.dim_in, self.dim_out = dim_in, dim_out
        self.compute_dtype = jnp.dtype(compute_dtype)

        cfg = _hw_config()
        self.vmem_limit = cfg["vmem"]
        self.tm_max = cfg["tm"]

        in_bytes = self.compute_dtype.itemsize
        self.sublane = 32 // in_bytes  # 8 rows/vreg for f32, 16 for bf16

        # ---- N tile (lane-dense, multiple of 128) -------------------------
        n_p128 = _round_up(dim_out, 128)
        tn = min(cfg["tn"], n_p128)
        # v7x megacore: keep >= 2 N blocks when dim_out allows it so the
        # "parallel" axes can be sharded across both TensorCores.
        if cfg["two_cores"] and tn >= n_p128 and n_p128 >= 256:
            tn = _round_up(n_p128 // 2, 128)
        self.tn = tn

        # ---- K tile: collapse the reduction grid axis when K fits VMEM ----
        k_p128 = _round_up(dim_in, 128)
        out_bytes = 4  # worst case f32 output
        if _fits_vmem(cfg["tm"], tn, k_p128, in_bytes, out_bytes,
                      k_split=False, vmem_limit=self.vmem_limit):
            self.tk = k_p128
            self.k_split = False
        else:
            self.tk = min(cfg["tk"], k_p128)
            self.k_split = True

        self.k_p = _round_up(dim_in, self.tk)
        self.n_p = _round_up(dim_out, self.tn)

        # ---- one-time cast + pad (hoisted out of the forward hot path) ----
        # K zero-padding is required for correctness of the reduction;
        # N padding only produces columns that are sliced off.
        w = weight.astype(self.compute_dtype)
        if (self.k_p, self.n_p) != (dim_in, dim_out):
            w = jnp.pad(w, ((0, self.k_p - dim_in), (0, self.n_p - dim_out)))
        self.w_p = w

        b = bias.astype(jnp.float32)
        if self.n_p != dim_out:
            b = jnp.pad(b, (0, self.n_p - dim_out))
        self.b_p = b.reshape(1, self.n_p)

    def __call__(self, x: jax.Array) -> jax.Array:
        n, dim_in = x.shape
        assert dim_in == self.dim_in, (dim_in, self.dim_in)
        out_dtype = x.dtype

        if x.dtype != self.compute_dtype:
            x = x.astype(self.compute_dtype)

        tm = min(self.tm_max, _round_up(n, self.sublane))
        m_p = _round_up(n, tm)
        if (m_p, self.k_p) != (n, dim_in):  # static shapes -> Python-level skip
            x = jnp.pad(x, ((0, m_p - n), (0, self.k_p - dim_in)))

        grid_m = m_p // tm
        grid_n = self.n_p // self.tn
        grid_k = self.k_p // self.tk

        flops = 2 * m_p * self.k_p * self.n_p
        bytes_accessed = int(
            x.size * x.dtype.itemsize
            + self.w_p.size * self.w_p.dtype.itemsize
            + self.b_p.size * self.b_p.dtype.itemsize
            + m_p * self.n_p * jnp.dtype(out_dtype).itemsize
        )
        cost = pl.CostEstimate(
            flops=flops, transcendentals=0, bytes_accessed=bytes_accessed
        )

        if not self.k_split:
            out_p = pl.pallas_call(
                _linear_kernel_fused_k,
                out_shape=jax.ShapeDtypeStruct((m_p, self.n_p), out_dtype),
                grid=(grid_m, grid_n),
                in_specs=[
                    pl.BlockSpec((tm, self.tk), lambda i, j: (i, 0)),       # x
                    pl.BlockSpec((self.tk, self.tn), lambda i, j: (0, j)),  # w
                    pl.BlockSpec((1, self.tn), lambda i, j: (0, j)),        # b
                ],
                out_specs=pl.BlockSpec((tm, self.tn), lambda i, j: (i, j)),
                compiler_params=pltpu.CompilerParams(
                    dimension_semantics=("parallel", "parallel"),
                    vmem_limit_bytes=self.vmem_limit,
                ),
                cost_estimate=cost,
            )(x, self.w_p, self.b_p)
        else:
            out_p = pl.pallas_call(
                _linear_kernel_split_k,
                out_shape=jax.ShapeDtypeStruct((m_p, self.n_p), out_dtype),
                grid=(grid_m, grid_n, grid_k),
                in_specs=[
                    pl.BlockSpec((tm, self.tk), lambda i, j, k: (i, k)),       # x
                    pl.BlockSpec((self.tk, self.tn), lambda i, j, k: (k, j)),  # w
                    pl.BlockSpec((1, self.tn), lambda i, j, k: (0, j)),        # b
                ],
                out_specs=pl.BlockSpec((tm, self.tn), lambda i, j, k: (i, j)),
                scratch_shapes=[pltpu.VMEM((tm, self.tn), jnp.float32)],
                compiler_params=pltpu.CompilerParams(
                    dimension_semantics=("parallel", "parallel", "arbitrary"),
                    vmem_limit_bytes=self.vmem_limit,
                ),
                cost_estimate=cost,
            )(x, self.w_p, self.b_p)

        if (m_p, self.n_p) != (n, self.dim_out):  # skip no-op slice
            out_p = out_p[:n, : self.dim_out]
        return out_p


def linear_layer(x: jax.Array, weight: jax.Array, bias: jax.Array, *,
                 compute_dtype=jnp.bfloat16) -> jax.Array:
    """Functional convenience wrapper: builds PallasLinear and applies it."""
    return PallasLinear(weight, bias, compute_dtype=compute_dtype)(x)


if __name__ == "__main__":
    # Module shapes: x (n, dim_in) -> y (n, dim_out). Tiny demo shapes: at
    # these sizes the call is pure launch/DMA overhead; the tiling pays off at
    # real layer sizes (n >= 256, dims multiples of 128).
    n, dim_in, dim_out = 8, 32, 16

    key = jax.random.PRNGKey(0)
    kx, kw, kb = jax.random.split(key, 3)

    # Deterministic init mirroring the module: uniform in [-alpha, alpha].
    alpha = 1.0 / (dim_in ** 0.5)
    weight = jax.random.uniform(
        kw, (dim_in, dim_out), dtype=jnp.float32, minval=-alpha, maxval=alpha
    )
    bias = jax.random.uniform(
        kb, (dim_out,), dtype=jnp.float32, minval=-alpha, maxval=alpha
    )
    x = jax.random.normal(kx, (n, dim_in), dtype=jnp.float32)

    y_ref = x @ weight + bias

    # Performance default: bf16 operands on the bf16-native MXU, f32 accumulate.
    layer = PallasLinear(weight, bias)  # weight/bias cast+pad once here
    y_bf16 = layer(x)
    jax.block_until_ready(y_bf16)
    assert y_bf16.shape == (n, dim_out)
    assert jnp.allclose(y_bf16, y_ref, atol=5e-2, rtol=5e-2)

    # Opt-in f32 path: matches torch.mm(x, self.weight) + self.bias exactly.
    y_f32 = linear_layer(x, weight, bias, compute_dtype=jnp.float32)
    jax.block_until_ready(y_f32)
    assert y_f32.shape == (n, dim_out)
    assert jnp.allclose(y_f32, y_ref, atol=1e-5, rtol=1e-5)

    print("KERNEL_OK")
</pallas_src>

<mosaic_0001>
module attributes {stable_mosaic.version = 11 : i64} {
  func.func @_linear_kernel_fused_k(%arg0: i32, %arg1: i32, %arg2: memref<16x128xbf16, #tpu.memory_space<vmem>>, %arg3: memref<128x128xbf16, #tpu.memory_space<vmem>>, %arg4: memref<1x128xf32, #tpu.memory_space<vmem>>, %arg5: memref<16x128xf32, #tpu.memory_space<vmem>>) attributes {dimension_semantics = [#tpu.dimension_semantics<parallel>, #tpu.dimension_semantics<parallel>], iteration_bounds = array<i64: 1, 1>, scalar_prefetch = 0 : i64, scratch_operands = 0 : i64, tpu.core_type = #tpu.core_type<tc>, window_params = [{transform_indices = @transform_0, window_bounds = array<i64: 16, 128>}, {transform_indices = @transform_1, window_bounds = array<i64: 128, 128>}, {transform_indices = @transform_2, window_bounds = array<i64: 1, 128>}, {transform_indices = @transform_3, window_bounds = array<i64: 16, 128>}]} {
    %c0 = arith.constant 0 : index
    %c0_0 = arith.constant 0 : index
    %0 = vector.load %arg2[%c0, %c0_0] : memref<16x128xbf16, #tpu.memory_space<vmem>>, vector<16x128xbf16>
    %c0_1 = arith.constant 0 : index
    %c0_2 = arith.constant 0 : index
    %1 = vector.load %arg3[%c0_1, %c0_2] : memref<128x128xbf16, #tpu.memory_space<vmem>>, vector<128x128xbf16>
    %cst = arith.constant dense<0.000000e+00> : vector<16x128xf32>
    %2 = tpu.matmul %0, %1, %cst {dimension_numbers = #tpu.dot_dimension_numbers<[1], [0], [0], [1], [0, 0, 1, 1], [], []>} : vector<16x128xbf16>, vector<128x128xbf16>, vector<16x128xf32> -> vector<16x128xf32>
    %c0_3 = arith.constant 0 : index
    %c0_4 = arith.constant 0 : index
    %3 = vector.load %arg4[%c0_3, %c0_4] : memref<1x128xf32, #tpu.memory_space<vmem>>, vector<1x128xf32>
    %4 = vector.broadcast %3 : vector<1x128xf32> to vector<16x128xf32>
    %5 = arith.addf %2, %4 : vector<16x128xf32>
    %c0_5 = arith.constant 0 : index
    %c0_6 = arith.constant 0 : index
    %6 = vector.load %arg5[%c0_5, %c0_6] : memref<16x128xf32, #tpu.memory_space<vmem>>, vector<16x128xf32>
    tpu.vector_store %arg5[%c0_5, %c0_6], %5 {strides = array<i32>} : memref<16x128xf32, #tpu.memory_space<vmem>>, vector<16x128xf32>,
    return
  }
  func.func @transform_0(%arg0: i32, %arg1: i32) -> (i32, i32) {
    %c0_i32 = arith.constant 0 : i32
    %c0_i32_0 = arith.constant 0 : i32
    return %arg0, %c0_i32 : i32, i32
  }
  func.func @transform_1(%arg0: i32, %arg1: i32) -> (i32, i32) {
    %c0_i32 = arith.constant 0 : i32
    %c0_i32_0 = arith.constant 0 : i32
    return %c0_i32, %arg1 : i32, i32
  }
  func.func @transform_2(%arg0: i32, %arg1: i32) -> (i32, i32) {
    %c0_i32 = arith.constant 0 : i32
    %c0_i32_0 = arith.constant 0 : i32
    return %c0_i32, %arg1 : i32, i32
  }
  func.func @transform_3(%arg0: i32, %arg1: i32) -> (i32, i32) {
    %c0_i32 = arith.constant 0 : i32
    return %arg0, %arg1 : i32, i32
  }
}

</mosaic_0001>

<llo_original>
// kernel: tpu_custom_call.1
$region0: #{tpu_custom_call.1}
  #allocation0 [shape = 'u32[]', space=smem, size = 0x4, offset = 0x4, fixed_abs, tag = 'smem constant byte address 0x4 - core index']
  #allocation1 [shape = 'u32[144,128]{1,0:T(1,128)}', space=vmem, size = 0x12000, scoped, tag = 'internal scratch']
  %s0 = inlined_call_operand.hbm [shape: bf16[16,128], index: 0, kind: input, shape index: {}]
  %s1 = inlined_call_operand.hbm [shape: bf16[128,128], index: 1, kind: input, shape index: {}]
  %s2 = inlined_call_operand.vmem [shape: f32[1,128], index: 2, kind: input, shape index: {}]
  %s3 = inlined_call_operand.hbm [shape: f32[16,128], index: 3, kind: output, shape index: {}]
  %s4 = sld [smem:[#allocation0]]
  $region30: #{tpu_custom_call.1} parent=0
    _
  %s6 = ssub.s32 1, %s4
  %s7 = scalar_select 0, %s6, %s4
  $region1: #{tpu_custom_call.1} parent=0
    #allocation2 [shape = 'u8[4096]{0}', space=vmem, size = 0x1000, scoped, tag = 'input window, operand 0, single buffered']
    #allocation3 [shape = 's32[1]{0}', space=sflag, size = 0x4, scoped, tag = 'scoped memory for tpu_custom_call.1']
    #allocation4 [shape = 's32[1]{0}', space=sflag, size = 0x4, scoped, tag = 'scoped memory for tpu_custom_call.1']
    #allocation5 [shape = 'u8[32768]{0}', space=vmem, size = 0x8000, scoped, tag = 'input window, operand 1, single buffered']
    #allocation6 [shape = 's32[1]{0}', space=sflag, size = 0x4, scoped, tag = 'scoped memory for tpu_custom_call.1']
    #allocation7 [shape = 'u8[8192]{0}', space=vmem, size = 0x2000, scoped, tag = 'output window, operand 0, single buffered']
    %8 = vsyncpa [#allocation3], 0
    %9 = vsyncpa [#allocation6], 0
    %10 = vsyncpa [#allocation4], 0
    // Predicated region
    $region2: #{tpu_custom_call.1} parent=1 // pred_check
      _
    $region3: #{tpu_custom_call.1} parent=1 // pred_check_branch
      %12 = sbr.rel (0) target = $region5
    $region4: #{tpu_custom_call.1} parent=1 // pred_region
      %s14 = ssub.s32 128, 128
      %15 = vsyncadd [#allocation3], %s14
      %s16 = sshll.u32 [#allocation2], 4
      %s17 = int_to_ptr.vmem [resolvable:$true] %s16
      %22 = dma.hbm_to_vmem [thread:$0]  %s0, 128, %s17, [#allocation3], 64, 64, 4
    $region5: #{tpu_custom_call.1} parent=1 // pred_fallthru
      _
    // Predicated region
    $region6: #{tpu_custom_call.1} parent=1 // pred_check
      _
    $region7: #{tpu_custom_call.1} parent=1 // pred_check_branch
      %24 = sbr.rel (0) target = $region9
    $region8: #{tpu_custom_call.1} parent=1 // pred_region
      %s26 = ssub.s32 1024, 1024
      %27 = vsyncadd [#allocation6], %s26
      %s28 = sshll.u32 [#allocation5], 4
      %s29 = int_to_ptr.vmem [resolvable:$true] %s28
      %34 = dma.hbm_to_vmem [thread:$0]  %s1, 1024, %s29, [#allocation6], 64, 64, 4
    $region9: #{tpu_custom_call.1} parent=1 // pred_fallthru
      _
    // Predicated region
    $region10: #{tpu_custom_call.1} parent=1 // pred_check
      _
    $region11: #{tpu_custom_call.1} parent=1 // pred_check_branch
      %36 = sbr.rel (0) target = $region13
    $region12: #{tpu_custom_call.1} parent=1 // pred_region
      _
    $region13: #{tpu_custom_call.1} parent=1 // pred_fallthru
      _
    // Predicated region
    $region14: #{tpu_custom_call.1} parent=1 // pred_check
      _
    $region15: #{tpu_custom_call.1} parent=1 // pred_check_branch
      %38 = sbr.rel (0) target = $region17
    $region16: #{tpu_custom_call.1} parent=1 // pred_region
      %39 = dma.done [#allocation3], 128
    $region17: #{tpu_custom_call.1} parent=1 // pred_fallthru
      _
    // Predicated region
    $region18: #{tpu_custom_call.1} parent=1 // pred_check
      _
    $region19: #{tpu_custom_call.1} parent=1 // pred_check_branch
      %41 = sbr.rel (0) target = $region21
    $region20: #{tpu_custom_call.1} parent=1 // pred_region
      %42 = dma.done [#allocation6], 1024
    $region21: #{tpu_custom_call.1} parent=1 // pred_fallthru
      _
    %v44 = vld [vmem:[#allocation2] sm:$0xf]
    %v45 = vld [vmem:[#allocation2 + $0x4] sm:$0xf]
    %v46 = vld [vmem:[#allocation5] sm:$0xf]
    %v47 = vld [vmem:[#allocation5 + $0x4] sm:$0xf]
    %v48 = vld [vmem:[#allocation5 + $0x8] sm:$0xf]
    %v49 = vld [vmem:[#allocation5 + $0xc] sm:$0xf]
    %v50 = vld [vmem:[#allocation5 + $0x10] sm:$0xf]
    %v51 = vld [vmem:[#allocation5 + $0x14] sm:$0xf]
    %v52 = vld [vmem:[#allocation5 + $0x18] sm:$0xf]
    %v53 = vld [vmem:[#allocation5 + $0x1c] sm:$0xf]
    %v54 = vld [vmem:[#allocation5 + $0x20] sm:$0xf]
    %v55 = vld [vmem:[#allocation5 + $0x24] sm:$0xf]
    %v56 = vld [vmem:[#allocation5 + $0x28] sm:$0xf]
    %v57 = vld [vmem:[#allocation5 + $0x2c] sm:$0xf]
    %v58 = vld [vmem:[#allocation5 + $0x30] sm:$0xf]
    %v59 = vld [vmem:[#allocation5 + $0x34] sm:$0xf]
    %v60 = vld [vmem:[#allocation5 + $0x38] sm:$0xf]
    %v61 = vld [vmem:[#allocation5 + $0x3c] sm:$0xf]
    %v62 = vld [vmem:[%s2] sm:$0x1]
    %v64 = vlaneseq
    %v65 = vshrl.u32 %v64, 7
    %v66 = vsub.s32 0, %v65
    %v67 = vrot.slane %v62, %v66
    %v71 = vunpack.c.l.b16 %v44
    %v72 = vunpack.c.l.b16 %v45
    %v73 = vpack.c.b16 %v72, %v71
    %v91 = vunpack.c.l.b16 %v46
    %v92 = vunpack.c.l.b16 %v47
    %v93 = vunpack.c.l.b16 %v48
    %v94 = vunpack.c.l.b16 %v49
    %v95 = vunpack.c.l.b16 %v50
    %v96 = vunpack.c.l.b16 %v51
    %v97 = vunpack.c.l.b16 %v52
    %v98 = vunpack.c.l.b16 %v53
    %v99 = vunpack.c.l.b16 %v54
    %v100 = vunpack.c.l.b16 %v55
    %v101 = vunpack.c.l.b16 %v56
    %v102 = vunpack.c.l.b16 %v57
    %v103 = vunpack.c.l.b16 %v58
    %v104 = vunpack.c.l.b16 %v59
    %v105 = vunpack.c.l.b16 %v60
    %v106 = vunpack.c.l.b16 %v61
    %v107 = vpack.c.b16 %v92, %v91
    %v108 = vpack.c.b16 %v94, %v93
    %v109 = vpack.c.b16 %v96, %v95
    %v110 = vpack.c.b16 %v98, %v97
    %v111 = vpack.c.b16 %v100, %v99
    %v112 = vpack.c.b16 %v102, %v101
    %v113 = vpack.c.b16 %v104, %v103
    %v114 = vpack.c.b16 %v106, %v105
    %123 = vmatprep.subr.bf16.mxu0 0
    %124 = vmatpush1.bf16.msra.mxu0 %v107
    %125 = vmatprep.subr.bf16.mxu0 0
    %126 = vmatpush1.bf16.msra.mxu0 %v108
    %127 = vmatprep.subr.bf16.mxu0 0
    %128 = vmatpush1.bf16.msra.mxu0 %v109
    %129 = vmatprep.subr.bf16.mxu0 0
    %130 = vmatpush1.bf16.msra.mxu0 %v110
    %131 = vmatprep.subr.bf16.mxu0 0
    %132 = vmatpush1.bf16.msra.mxu0 %v111
    %133 = vmatprep.subr.bf16.mxu0 0
    %134 = vmatpush1.bf16.msra.mxu0 %v112
    %135 = vmatprep.subr.bf16.mxu0 0
    %136 = vmatpush1.bf16.msra.mxu0 %v113
    %137 = vmatprep.subr.bf16.mxu0 0
    %138 = vmatpush1.bf16.msra.mxu0 %v114
    %139 = vmatprep.subr.bf16.mxu0 0
    %140 = vmatpush1.bf16.msra.mxu0 0
    %141 = vmatprep.subr.bf16.mxu0 0
    %142 = vmatpush1.bf16.msra.mxu0 0
    %143 = vmatprep.subr.bf16.mxu0 0
    %144 = vmatpush1.bf16.msra.mxu0 0
    %145 = vmatprep.subr.bf16.mxu0 0
    %146 = vmatpush1.bf16.msra.mxu0 0
    %147 = vmatprep.subr.bf16.mxu0 0
    %148 = vmatpush1.bf16.msra.mxu0 0
    %149 = vmatprep.subr.bf16.mxu0 0
    %150 = vmatpush1.bf16.msra.mxu0 0
    %151 = vmatprep.subr.bf16.mxu0 0
    %152 = vmatpush1.bf16.msra.mxu0 0
    %153 = vmatprep.subr.bf16.mxu0 0
    %154 = vmatpush1.bf16.msra.mxu0 0
    %155 = vmatprep.mubr.bf16.mxu0 0
    %156 = vmatmul.mubr.bf16.gmra.mrb[0].mxu0 %v73
    %v157 = vpop.f32.mrb[0].mxu0
    %v158 = vadd.f32 %v67, %v157
    %v159 = vpop.f32.mrb[0].mxu0
    %v160 = vpop.f32.mrb[0].mxu0
    %v161 = vadd.f32 %v67, %v160
    %v162 = vpop.f32.mrb[0].mxu0
    %163 = vdwg.mxu0
    %164 = vst [vmem:[#allocation7] sm:$0xff] %v158
    %165 = vst [vmem:[#allocation7 + $0x8] sm:$0xff] %v161
    // Predicated region
    $region22: #{tpu_custom_call.1} parent=1 // pred_check
      _
    $region23: #{tpu_custom_call.1} parent=1 // pred_check_branch
      %167 = sbr.rel (0) target = $region25
    $region24: #{tpu_custom_call.1} parent=1 // pred_region
      %s169 = ssub.s32 256, 256
      %170 = vsyncadd [#allocation4], %s169
      %s171 = sshll.u32 [#allocation7], 4
      %s172 = int_to_ptr.vmem [resolvable:$true] %s171
      %177 = dma.vmem_to_hbm [thread:$0]  %s172, 256, %s3, [#allocation4], 128, 128, 8
    $region25: #{tpu_custom_call.1} parent=1 // pred_fallthru
      _
    // Predicated region
    $region26: #{tpu_custom_call.1} parent=1 // pred_check
      _
    $region27: #{tpu_custom_call.1} parent=1 // pred_check_branch
      %179 = sbr.rel (0) target = $region29
    $region28: #{tpu_custom_call.1} parent=1 // pred_region
      %180 = dma.done [#allocation4], 256
    $region29: #{tpu_custom_call.1} parent=1 // pred_fallthru
      _
    %181 = vsyncpa [#allocation3], 1
    %182 = vsyncpa [#allocation6], 1
    %183 = vsyncpa [#allocation4], 1

</llo_original>
